<compile_context>
chip_gen: v6e
topology: v6e:2x2x1
jax: 0.10.0
libtpu: 0.0.40
codegen_flags: <defaults>
</compile_context>

<pallas_src>
import functools

import jax
import jax.numpy as jnp
from jax.experimental import pallas as pl
from jax.experimental.pallas import tpu as pltpu

_LANE = 128


def _round_up(x, m):
    return ((x + m - 1) // m) * m


def _cdiv(a, b):
    return (a + b - 1) // b


def _hw_budget():
    """Returns (VMEM budget cap in bytes, default max M tile) per generation."""
    try:
        vmem_cap = int(pltpu.get_tpu_info().vmem_capacity_bytes)
    except Exception:
        vmem_cap = 64 << 20  # conservative: v7x per-TensorCore VMEM
    if vmem_cap >= (96 << 20):  # v5e / v6e: 128 MiB VMEM
        return min(vmem_cap - (16 << 20), 100 << 20), 1024
    # v7x: 64 MiB physical VMEM — keep headroom for compiler-internal scratch
    return min(max(vmem_cap - (8 << 20), 16 << 20), 56 << 20), 512


# ----------------------------------------------------------------------------
# Kernel 1 (runs ONCE per call): mask the reshaped / zero-padded weights+bias.
# Shapes: w/wm (K_pad, C_out_pad), b/bm (1, C_out_pad).  Whole arrays in VMEM.
# masked_w is emitted directly in the matmul dtype (bf16 fast path).
# ----------------------------------------------------------------------------
def _mask_params_kernel(w_ref, wm_ref, b_ref, bm_ref, mw_ref, mb_ref, *,
                        temp, ticket):
    if ticket:
        # strict > 0, matching the PyTorch module's (mask > 0).float()
        w_mask = (wm_ref[...] > 0).astype(jnp.float32)
        b_mask = (bm_ref[...] > 0).astype(jnp.float32)
    else:
        w_mask = jax.nn.sigmoid(temp * wm_ref[...])
        b_mask = jax.nn.sigmoid(temp * bm_ref[...])
    mw_ref[...] = (w_ref[...] * w_mask).astype(mw_ref.dtype)
    mb_ref[...] = (b_ref[...] * b_mask).astype(mb_ref.dtype)


# ----------------------------------------------------------------------------
# Kernel 2a: untiled-K matmul  out = patches @ masked_w + masked_b.
# grid = (M tiles,); masked_w index_map is constant -> stays VMEM-resident.
# ----------------------------------------------------------------------------
def _conv_matmul_kernel(p_ref, w_ref, b_ref, o_ref):
    o_ref[...] = (jnp.dot(p_ref[...], w_ref[...],
                          preferred_element_type=jnp.float32)
                  + b_ref[...]).astype(o_ref.dtype)


# ----------------------------------------------------------------------------
# Kernel 2b: K-tiled matmul, accumulating directly into the resident o_ref
# (output block index constant along K), bias added at the last K step.
# grid = (M tiles [parallel], K tiles [arbitrary, reduction]).
# ----------------------------------------------------------------------------
def _conv_matmul_ktiled_kernel(p_ref, w_ref, b_ref, o_ref):
    k = pl.program_id(1)

    @pl.when(k == 0)
    def _():
        o_ref[...] = jnp.zeros_like(o_ref)

    o_ref[...] += jnp.dot(p_ref[...], w_ref[...],
                          preferred_element_type=jnp.float32)

    @pl.when(k == pl.num_programs(1) - 1)
    def _():
        o_ref[...] += b_ref[...]


def soft_masked_conv2d(x, weight, bias, weight_mask, bias_mask, *,
                       stride=1, padding=1, temp=1.0, ticket=False,
                       use_bf16=True, tile_m_max=None, out_layout="NCHW"):
    """Forward pass of SoftMaskedConv2d.

    x:            (N, C_in, H, W)        float32, NCHW
    weight:       (C_out, C_in, k, k)    float32
    bias:         (C_out,)               float32
    weight_mask:  (C_out, C_in, k, k)    float32
    bias_mask:    (C_out,)               float32
    returns:      (N, C_out, H_out, W_out) float32 NCHW (or NHWC if requested)
    """
    n, c_in, h, w = x.shape
    c_out, _, kh, kw = weight.shape
    h_out = (h + 2 * padding - kh) // stride + 1
    w_out = (w + 2 * padding - kw) // stride + 1

    k_dim = c_in * kh * kw
    m_dim = n * h_out * w_out

    mm_dtype = jnp.bfloat16 if use_bf16 else jnp.float32
    in_elt = 2 if use_bf16 else 4

    vmem_cap, default_tile_m = _hw_budget()
    if tile_m_max is None:
        tile_m_max = default_tile_m

    # ---- padded problem dims (128-lane granularity only) ---------------------
    c_out_pad = _round_up(c_out, _LANE)     # lane-dense output / full MXU N
    k_pad = _round_up(k_dim, _LANE)         # lane-dense contraction

    # ---- K tiling: keep masked_w VMEM-resident (untiled K) when it fits ------
    w_krow_bytes = c_out_pad * in_elt       # bytes per K row of masked_w
    if 2 * k_pad * w_krow_bytes <= vmem_cap // 3:
        tile_k = k_pad                      # grid = (M,), weight DMA'd once
    else:
        tile_k = _LANE
        d = k_pad // _LANE
        for f in range(d, 0, -1):           # largest 128-mult divisor that fits
            if d % f == 0 and 2 * (f * _LANE) * w_krow_bytes <= vmem_cap // 3:
                tile_k = f * _LANE
                break
    k_tiles = k_pad // tile_k

    # ---- M tiling: big tiles; >= 2 (and preferably even) tiles for 2 TCs -----
    tile_m = int(tile_m_max)
    while tile_m > 128 and _cdiv(m_dim, tile_m) < 2:
        tile_m //= 2
    if (tile_m > 128 and _cdiv(m_dim, tile_m) % 2 == 1
            and _cdiv(m_dim, tile_m // 2) % 2 == 0):
        tile_m //= 2

    def _vmem_est(tm, tk):
        return (2 * tm * tk * in_elt            # patches tile (double-buffered)
                + 2 * tk * c_out_pad * in_elt   # masked_w tile (double-buffered)
                + 2 * 8 * c_out_pad * 4         # bias (sublane-padded to 8 rows)
                + 2 * tm * c_out_pad * 4)       # f32 output tile (double-buffered)

    while tile_m > 128 and _vmem_est(tile_m, tile_k) > vmem_cap:
        tile_m //= 2

    m_tiles = _cdiv(m_dim, tile_m)
    m_total = m_tiles * tile_m
    vmem_limit = int(min(max(2 * _vmem_est(tile_m, tile_k), 16 << 20), vmem_cap))

    # ---- glue: im2col (plain JAX), cast to the matmul dtype at the source ----
    # TODO(synk): fuse im2col into the matmul kernel (grid over (N, H_out tiles)
    #   with halo'd NHWC input blocks + in-kernel pl.ds shifts) to remove the
    #   kh*kw HBM blowup of this materialized patch matrix.
    xp = jnp.pad(x.astype(mm_dtype),
                 ((0, 0), (0, 0), (padding, padding), (padding, padding)))
    cols = []
    for i in range(kh):
        for j in range(kw):
            cols.append(
                xp[:, :, i:i + stride * h_out:stride, j:j + stride * w_out:stride]
            )  # (N, C_in, H_out, W_out)
    # (N, C_in, kh*kw, H_out, W_out) -> (N, H_out, W_out, C_in, kh*kw)
    patches = jnp.stack(cols, axis=2).transpose(0, 3, 4, 1, 2)
    patches = patches.reshape(m_dim, k_dim)
    if m_total != m_dim or k_pad != k_dim:
        # zero rows/cols are exact no-ops in the matmul
        patches = jnp.pad(patches, ((0, m_total - m_dim), (0, k_pad - k_dim)))

    # weight / mask -> (K_pad, C_out_pad); bias -> (1, C_out_pad)
    w2d = weight.reshape(c_out, k_dim).T.astype(jnp.float32)
    wm2d = weight_mask.reshape(c_out, k_dim).T.astype(jnp.float32)
    w2d = jnp.pad(w2d, ((0, k_pad - k_dim), (0, c_out_pad - c_out)))
    wm2d = jnp.pad(wm2d, ((0, k_pad - k_dim), (0, c_out_pad - c_out)))
    b2d = jnp.pad(bias.reshape(1, c_out).astype(jnp.float32),
                  ((0, 0), (0, c_out_pad - c_out)))
    bm2d = jnp.pad(bias_mask.reshape(1, c_out).astype(jnp.float32),
                   ((0, 0), (0, c_out_pad - c_out)))

    # ---- kernel 1: mask the parameters once (whole arrays resident in VMEM) --
    masked_w, masked_b = pl.pallas_call(
        functools.partial(_mask_params_kernel,
                          temp=float(temp), ticket=bool(ticket)),
        out_shape=(
            jax.ShapeDtypeStruct((k_pad, c_out_pad), mm_dtype),   # matmul dtype
            jax.ShapeDtypeStruct((1, c_out_pad), jnp.float32),
        ),
    )(w2d, wm2d, b2d, bm2d)

    # ---- kernel 2: tiled matmul + bias ----------------------------------------
    if k_tiles == 1:
        grid = (m_tiles,)
        kernel = _conv_matmul_kernel
        in_specs = [
            pl.BlockSpec((tile_m, tile_k), lambda i: (i, 0)),      # patches
            pl.BlockSpec((tile_k, c_out_pad), lambda i: (0, 0)),   # masked_w (resident)
            pl.BlockSpec((1, c_out_pad), lambda i: (0, 0)),        # masked_b
        ]
        out_specs = pl.BlockSpec((tile_m, c_out_pad), lambda i: (i, 0))
        dim_sem = ("parallel",)
    else:
        grid = (m_tiles, k_tiles)
        kernel = _conv_matmul_ktiled_kernel
        in_specs = [
            pl.BlockSpec((tile_m, tile_k), lambda i, k: (i, k)),      # patches
            pl.BlockSpec((tile_k, c_out_pad), lambda i, k: (k, 0)),   # masked_w
            pl.BlockSpec((1, c_out_pad), lambda i, k: (0, 0)),        # masked_b
        ]
        out_specs = pl.BlockSpec((tile_m, c_out_pad), lambda i, k: (i, 0))
        dim_sem = ("parallel", "arbitrary")

    out_flat = pl.pallas_call(
        kernel,
        out_shape=jax.ShapeDtypeStruct((m_total, c_out_pad), jnp.float32),
        grid_spec=pltpu.PrefetchScalarGridSpec(
            num_scalar_prefetch=0,
            grid=grid,
            in_specs=in_specs,
            out_specs=out_specs,
        ),
        compiler_params=pltpu.CompilerParams(
            dimension_semantics=dim_sem,
            vmem_limit_bytes=vmem_limit,
        ),
    )(patches, masked_w, masked_b)

    # drop M / C_out padding; output is already lane-dense NHWC
    out_flat = out_flat[:m_dim, :c_out]
    out_nhwc = out_flat.reshape(n, h_out, w_out, c_out)
    if out_layout == "NHWC":
        return out_nhwc
    # NCHW transpose kept only for F.conv2d / PyTorch layout parity
    return out_nhwc.transpose(0, 3, 1, 2)


if __name__ == "__main__":
    # Module hyperparameters (small, consistent with the PyTorch module)
    N, C_IN, H, W = 2, 4, 16, 16
    C_OUT, K = 8, 3
    STRIDE, PADDING, TEMP, TICKET = 1, 1, 1.0, False

    key = jax.random.PRNGKey(0)
    kx, kw_, kb, kwm = jax.random.split(key, 4)

    x = jax.random.normal(kx, (N, C_IN, H, W), dtype=jnp.float32)

    # nn.init.xavier_normal_(weight): std = sqrt(2 / (fan_in + fan_out))
    fan_in, fan_out = C_IN * K * K, C_OUT * K * K
    xavier_std = (2.0 / (fan_in + fan_out)) ** 0.5
    weight = xavier_std * jax.random.normal(kw_, (C_OUT, C_IN, K, K),
                                            dtype=jnp.float32)
    # bias is an uninitialized Parameter in the module; init deterministically
    bias = 0.1 * jax.random.normal(kb, (C_OUT,), dtype=jnp.float32)
    # init_mask(): masks initialized to mask_initial_value = 0.0
    weight_mask = jnp.zeros((C_OUT, C_IN, K, K), dtype=jnp.float32)
    bias_mask = jnp.zeros((C_OUT,), dtype=jnp.float32)

    # default fast path: bf16 MXU operands, f32 accumulation
    out = soft_masked_conv2d(x, weight, bias, weight_mask, bias_mask,
                             stride=STRIDE, padding=PADDING,
                             temp=TEMP, ticket=TICKET)
    out = jax.block_until_ready(out)
    assert out.shape == (N, C_OUT, H, W), out.shape

    # Reference check against XLA's conv (same semantics as F.conv2d, f32)
    mw = weight * jax.nn.sigmoid(TEMP * weight_mask)
    mb = bias * jax.nn.sigmoid(TEMP * bias_mask)
    ref = jax.lax.conv_general_dilated(
        x, mw, window_strides=(STRIDE, STRIDE),
        padding=((PADDING, PADDING), (PADDING, PADDING)),
        dimension_numbers=("NCHW", "OIHW", "NCHW"),
    ) + mb.reshape(1, C_OUT, 1, 1)

    # bf16 default path: loose tolerance (bf16 operand quantization)
    assert jnp.allclose(out, ref, atol=5e-2, rtol=5e-2), float(
        jnp.max(jnp.abs(out - ref)))

    # f32 debug path: tight tolerance
    out_f32 = soft_masked_conv2d(x, weight, bias, weight_mask, bias_mask,
                                 stride=STRIDE, padding=PADDING,
                                 temp=TEMP, ticket=TICKET, use_bf16=False)
    out_f32 = jax.block_until_ready(out_f32)
    assert jnp.allclose(out_f32, ref, atol=1e-4, rtol=1e-4), float(
        jnp.max(jnp.abs(out_f32 - ref)))

    print("KERNEL_OK")
</pallas_src>

<mosaic_0001>
module attributes {stable_mosaic.version = 11 : i64} {
  func.func @_mask_params_kernel(%arg0: memref<128x128xf32, #tpu.memory_space<vmem>>, %arg1: memref<128x128xf32, #tpu.memory_space<vmem>>, %arg2: memref<1x128xf32, #tpu.memory_space<vmem>>, %arg3: memref<1x128xf32, #tpu.memory_space<vmem>>, %arg4: memref<128x128xbf16, #tpu.memory_space<vmem>>, %arg5: memref<1x128xf32, #tpu.memory_space<vmem>>) attributes {dimension_semantics = [], scalar_prefetch = 0 : i64, scratch_operands = 0 : i64, tpu.core_type = #tpu.core_type<tc>} {
    %c0 = arith.constant 0 : index
    %c0_0 = arith.constant 0 : index
    %0 = vector.load %arg1[%c0, %c0_0] : memref<128x128xf32, #tpu.memory_space<vmem>>, vector<128x128xf32>
    %cst = arith.constant 1.000000e+00 : f32
    %1 = vector.broadcast %cst : f32 to vector<128x128xf32>
    %2 = arith.mulf %1, %0 : vector<128x128xf32>
    %3 = arith.negf %2 : vector<128x128xf32>
    %4 = math.exp %3 : vector<128x128xf32>
    %cst_1 = arith.constant 1.000000e+00 : f32
    %5 = vector.broadcast %cst_1 : f32 to vector<128x128xf32>
    %6 = arith.addf %5, %4 : vector<128x128xf32>
    %7 = arith.divf %5, %6 : vector<128x128xf32>
    %c0_2 = arith.constant 0 : index
    %c0_3 = arith.constant 0 : index
    %8 = vector.load %arg3[%c0_2, %c0_3] : memref<1x128xf32, #tpu.memory_space<vmem>>, vector<1x128xf32>
    %cst_4 = arith.constant 1.000000e+00 : f32
    %9 = vector.broadcast %cst_4 : f32 to vector<1x128xf32>
    %10 = arith.mulf %9, %8 : vector<1x128xf32>
    %11 = arith.negf %10 : vector<1x128xf32>
    %12 = math.exp %11 : vector<1x128xf32>
    %cst_5 = arith.constant 1.000000e+00 : f32
    %13 = vector.broadcast %cst_5 : f32 to vector<1x128xf32>
    %14 = arith.addf %13, %12 : vector<1x128xf32>
    %15 = arith.divf %13, %14 : vector<1x128xf32>
    %c0_6 = arith.constant 0 : index
    %c0_7 = arith.constant 0 : index
    %16 = vector.load %arg0[%c0_6, %c0_7] : memref<128x128xf32, #tpu.memory_space<vmem>>, vector<128x128xf32>
    %17 = arith.mulf %16, %7 : vector<128x128xf32>
    %18 = arith.truncf %17 : vector<128x128xf32> to vector<128x128xbf16>
    %c0_8 = arith.constant 0 : index
    %c0_9 = arith.constant 0 : index
    %19 = vector.load %arg4[%c0_8, %c0_9] : memref<128x128xbf16, #tpu.memory_space<vmem>>, vector<128x128xbf16>
    tpu.vector_store %arg4[%c0_8, %c0_9], %18 {strides = array<i32>} : memref<128x128xbf16, #tpu.memory_space<vmem>>, vector<128x128xbf16>,
    %c0_10 = arith.constant 0 : index
    %c0_11 = arith.constant 0 : index
    %20 = vector.load %arg2[%c0_10, %c0_11] : memref<1x128xf32, #tpu.memory_space<vmem>>, vector<1x128xf32>
    %21 = arith.mulf %20, %15 : vector<1x128xf32>
    %c0_12 = arith.constant 0 : index
    %c0_13 = arith.constant 0 : index
    %22 = vector.load %arg5[%c0_12, %c0_13] : memref<1x128xf32, #tpu.memory_space<vmem>>, vector<1x128xf32>
    tpu.vector_store %arg5[%c0_12, %c0_13], %21 {strides = array<i32>} : memref<1x128xf32, #tpu.memory_space<vmem>>, vector<1x128xf32>,
    return
  }
}

</mosaic_0001>

<llo_original>
// kernel: tpu_custom_call.1
$region0: #{tpu_custom_call.1}
  #allocation0 [shape = 'u32[]', space=smem, size = 0x4, offset = 0x4, fixed_abs, tag = 'smem constant byte address 0x4 - core index']
  #allocation1 [shape = 'u32[144,128]{1,0:T(1,128)}', space=vmem, size = 0x12000, scoped, tag = 'internal scratch']
  %s0 = inlined_call_operand.hbm [shape: f32[128,128], index: 0, kind: input, shape index: {}]
  %s1 = inlined_call_operand.hbm [shape: f32[128,128], index: 1, kind: input, shape index: {}]
  %s2 = inlined_call_operand.vmem [shape: f32[1,128], index: 2, kind: input, shape index: {}]
  %s3 = inlined_call_operand.vmem [shape: f32[1,128], index: 3, kind: input, shape index: {}]
  %s4 = inlined_call_operand.hbm [shape: bf16[128,128], index: 4, kind: output, shape index: {0}]
  %s5 = inlined_call_operand.hbm [shape: f32[1,128], index: 5, kind: output, shape index: {1}]
  %6 = xla_tuple %s4, %s5
  %s7 = sld [smem:[#allocation0]]
  $region42: #{tpu_custom_call.1} parent=0
    _
  %s9 = ssub.s32 1, %s7
  %s10 = scalar_select 0, %s9, %s7
  $region1: #{tpu_custom_call.1} parent=0
    #allocation2 [shape = 'u8[65536]{0}', space=vmem, size = 0x10000, scoped, tag = 'input window, operand 0, single buffered']
    #allocation3 [shape = 's32[1]{0}', space=sflag, size = 0x4, scoped, tag = 'scoped memory for tpu_custom_call.1']
    #allocation4 [shape = 's32[1]{0}', space=sflag, size = 0x4, scoped, tag = 'scoped memory for tpu_custom_call.1']
    #allocation5 [shape = 'u8[65536]{0}', space=vmem, size = 0x10000, scoped, tag = 'input window, operand 1, single buffered']
    #allocation6 [shape = 's32[1]{0}', space=sflag, size = 0x4, scoped, tag = 'scoped memory for tpu_custom_call.1']
    #allocation7 [shape = 'u8[32768]{0}', space=vmem, size = 0x8000, scoped, tag = 'output window, operand 0, single buffered']
    #allocation8 [shape = 'u8[512]{0}', space=vmem, size = 0x400, scoped, tag = 'output window, operand 1, single buffered']
    #allocation9 [shape = 's32[1]{0}', space=sflag, size = 0x4, scoped, tag = 'scoped memory for tpu_custom_call.1']
    %11 = vsyncpa [#allocation3], 0
    %12 = vsyncpa [#allocation6], 0
    %13 = vsyncpa [#allocation4], 0
    %14 = vsyncpa [#allocation9], 0
    // Predicated region
    $region2: #{tpu_custom_call.1} parent=1 // pred_check
      _
    $region3: #{tpu_custom_call.1} parent=1 // pred_check_branch
      %16 = sbr.rel (0) target = $region5
    $region4: #{tpu_custom_call.1} parent=1 // pred_region
      %s18 = ssub.s32 2048, 2048
      %19 = vsyncadd [#allocation3], %s18
      %s20 = sshll.u32 [#allocation2], 4
      %s21 = int_to_ptr.vmem [resolvable:$true] %s20
      %26 = dma.hbm_to_vmem [thread:$0]  %s0, 2048, %s21, [#allocation3], 128, 128, 8
    $region5: #{tpu_custom_call.1} parent=1 // pred_fallthru
      _
    // Predicated region
    $region6: #{tpu_custom_call.1} parent=1 // pred_check
      _
    $region7: #{tpu_custom_call.1} parent=1 // pred_check_branch
      %28 = sbr.rel (0) target = $region9
    $region8: #{tpu_custom_call.1} parent=1 // pred_region
      %s30 = ssub.s32 2048, 2048
      %31 = vsyncadd [#allocation6], %s30
      %s32 = sshll.u32 [#allocation5], 4
      %s33 = int_to_ptr.vmem [resolvable:$true] %s32
      %38 = dma.hbm_to_vmem [thread:$0]  %s1, 2048, %s33, [#allocation6], 128, 128, 8
    $region9: #{tpu_custom_call.1} parent=1 // pred_fallthru
      _
    // Predicated region
    $region10: #{tpu_custom_call.1} parent=1 // pred_check
      _
    $region11: #{tpu_custom_call.1} parent=1 // pred_check_branch
      %40 = sbr.rel (0) target = $region13
    $region12: #{tpu_custom_call.1} parent=1 // pred_region
      _
    $region13: #{tpu_custom_call.1} parent=1 // pred_fallthru
      _
    // Predicated region
    $region14: #{tpu_custom_call.1} parent=1 // pred_check
      _
    $region15: #{tpu_custom_call.1} parent=1 // pred_check_branch
      %42 = sbr.rel (0) target = $region17
    $region16: #{tpu_custom_call.1} parent=1 // pred_region
      _
    $region17: #{tpu_custom_call.1} parent=1 // pred_fallthru
      _
    // Predicated region
    $region18: #{tpu_custom_call.1} parent=1 // pred_check
      _
    $region19: #{tpu_custom_call.1} parent=1 // pred_check_branch
      %44 = sbr.rel (0) target = $region21
    $region20: #{tpu_custom_call.1} parent=1 // pred_region
      %45 = dma.done [#allocation3], 2048
    $region21: #{tpu_custom_call.1} parent=1 // pred_fallthru
      _
    // Predicated region
    $region22: #{tpu_custom_call.1} parent=1 // pred_check
      _
    $region23: #{tpu_custom_call.1} parent=1 // pred_check_branch
      %47 = sbr.rel (0) target = $region25
    $region24: #{tpu_custom_call.1} parent=1 // pred_region
      %48 = dma.done [#allocation6], 2048
    $region25: #{tpu_custom_call.1} parent=1 // pred_fallthru
      _
    %v49 = vld [vmem:[#allocation5] sm:$0xff]
    %v50 = vld [vmem:[#allocation5 + $0x8] sm:$0xff]
    %v51 = vld [vmem:[#allocation5 + $0x10] sm:$0xff]
    %v52 = vld [vmem:[#allocation5 + $0x18] sm:$0xff]
    %v53 = vld [vmem:[#allocation5 + $0x20] sm:$0xff]
    %v54 = vld [vmem:[#allocation5 + $0x28] sm:$0xff]
    %v55 = vld [vmem:[#allocation5 + $0x30] sm:$0xff]
    %v56 = vld [vmem:[#allocation5 + $0x38] sm:$0xff]
    %v57 = vld [vmem:[#allocation5 + $0x40] sm:$0xff]
    %v58 = vld [vmem:[#allocation5 + $0x48] sm:$0xff]
    %v59 = vld [vmem:[#allocation5 + $0x50] sm:$0xff]
    %v60 = vld [vmem:[#allocation5 + $0x58] sm:$0xff]
    %v61 = vld [vmem:[#allocation5 + $0x60] sm:$0xff]
    %v62 = vld [vmem:[#allocation5 + $0x68] sm:$0xff]
    %v63 = vld [vmem:[#allocation5 + $0x70] sm:$0xff]
    %v64 = vld [vmem:[#allocation5 + $0x78] sm:$0xff]
    %v65 = vxor.u32 %v49, 2147483648
    %v66 = vxor.u32 %v50, 2147483648
    %v67 = vxor.u32 %v51, 2147483648
    %v68 = vxor.u32 %v52, 2147483648
    %v69 = vxor.u32 %v53, 2147483648
    %v70 = vxor.u32 %v54, 2147483648
    %v71 = vxor.u32 %v55, 2147483648
    %v72 = vxor.u32 %v56, 2147483648
    %v73 = vxor.u32 %v57, 2147483648
    %v74 = vxor.u32 %v58, 2147483648
    %v75 = vxor.u32 %v59, 2147483648
    %v76 = vxor.u32 %v60, 2147483648
    %v77 = vxor.u32 %v61, 2147483648
    %v78 = vxor.u32 %v62, 2147483648
    %v79 = vxor.u32 %v63, 2147483648
    %v80 = vxor.u32 %v64, 2147483648
    %v81 = vmul.f32 %v65, 1.442695
    %v82 = vpow.pop %v81
    %v83 = vmul.f32 %v66, 1.442695
    %v84 = vpow.pop %v83
    %v85 = vmul.f32 %v67, 1.442695
    %v86 = vpow.pop %v85
    %v87 = vmul.f32 %v68, 1.442695
    %v88 = vpow.pop %v87
    %v89 = vmul.f32 %v69, 1.442695
    %v90 = vpow.pop %v89
    %v91 = vmul.f32 %v70, 1.442695
    %v92 = vpow.pop %v91
    %v93 = vmul.f32 %v71, 1.442695
    %v94 = vpow.pop %v93
    %v95 = vmul.f32 %v72, 1.442695
    %v96 = vpow.pop %v95
    %v97 = vmul.f32 %v73, 1.442695
    %v98 = vpow.pop %v97
    %v99 = vmul.f32 %v74, 1.442695
    %v100 = vpow.pop %v99
    %v101 = vmul.f32 %v75, 1.442695
    %v102 = vpow.pop %v101
    %v103 = vmul.f32 %v76, 1.442695
    %v104 = vpow.pop %v103
    %v105 = vmul.f32 %v77, 1.442695
    %v106 = vpow.pop %v105
    %v107 = vmul.f32 %v78, 1.442695
    %v108 = vpow.pop %v107
    %v109 = vmul.f32 %v79, 1.442695
    %v110 = vpow.pop %v109
    %v111 = vmul.f32 %v80, 1.442695
    %v112 = vpow.pop %v111
    %v113 = vadd.f32 %v82, 1.0
    %v114 = vadd.f32 %v84, 1.0
    %v115 = vadd.f32 %v86, 1.0
    %v116 = vadd.f32 %v88, 1.0
    %v117 = vadd.f32 %v90, 1.0
    %v118 = vadd.f32 %v92, 1.0
    %v119 = vadd.f32 %v94, 1.0
    %v120 = vadd.f32 %v96, 1.0
    %v121 = vadd.f32 %v98, 1.0
    %v122 = vadd.f32 %v100, 1.0
    %v123 = vadd.f32 %v102, 1.0
    %v124 = vadd.f32 %v104, 1.0
    %v125 = vadd.f32 %v106, 1.0
    %v126 = vadd.f32 %v108, 1.0
    %v127 = vadd.f32 %v110, 1.0
    %v128 = vadd.f32 %v112, 1.0
    %v129 = vrcp.pop %v113
    %v130 = vmul.f32 1.0, %v129
    %v131 = vrcp.pop %v114
    %v132 = vmul.f32 1.0, %v131
    %v133 = vrcp.pop %v115
    %v134 = vmul.f32 1.0, %v133
    %v135 = vrcp.pop %v116
    %v136 = vmul.f32 1.0, %v135
    %v137 = vrcp.pop %v117
    %v138 = vmul.f32 1.0, %v137
    %v139 = vrcp.pop %v118
    %v140 = vmul.f32 1.0, %v139
    %v141 = vrcp.pop %v119
    %v142 = vmul.f32 1.0, %v141
    %v143 = vrcp.pop %v120
    %v144 = vmul.f32 1.0, %v143
    %v145 = vrcp.pop %v121
    %v146 = vmul.f32 1.0, %v145
    %v147 = vrcp.pop %v122
    %v148 = vmul.f32 1.0, %v147
    %v149 = vrcp.pop %v123
    %v150 = vmul.f32 1.0, %v149
    %v151 = vrcp.pop %v124
    %v152 = vmul.f32 1.0, %v151
    %v153 = vrcp.pop %v125
    %v154 = vmul.f32 1.0, %v153
    %v155 = vrcp.pop %v126
    %v156 = vmul.f32 1.0, %v155
    %v157 = vrcp.pop %v127
    %v158 = vmul.f32 1.0, %v157
    %v159 = vrcp.pop %v128
    %v160 = vmul.f32 1.0, %v159
    %v161 = vld [vmem:[%s3] sm:$0x1]
    %v162 = vxor.u32 %v161, 2147483648
    %v163 = vmul.f32 %v162, 1.442695
    %v164 = vpow.pop %v163
    %v165 = vadd.f32 %v164, 1.0
    %v166 = vrcp.pop %v165
    %v167 = vmul.f32 1.0, %v166
    %v168 = vld [vmem:[#allocation2] sm:$0xff]
    %v169 = vld [vmem:[#allocation2 + $0x8] sm:$0xff]
    %v170 = vld [vmem:[#allocation2 + $0x10] sm:$0xff]
    %v171 = vld [vmem:[#allocation2 + $0x18] sm:$0xff]
    %v172 = vld [vmem:[#allocation2 + $0x20] sm:$0xff]
    %v173 = vld [vmem:[#allocation2 + $0x28] sm:$0xff]
    %v174 = vld [vmem:[#allocation2 + $0x30] sm:$0xff]
    %v175 = vld [vmem:[#allocation2 + $0x38] sm:$0xff]
    %v176 = vld [vmem:[#allocation2 + $0x40] sm:$0xff]
    %v177 = vld [vmem:[#allocation2 + $0x48] sm:$0xff]
    %v178 = vld [vmem:[#allocation2 + $0x50] sm:$0xff]
    %v179 = vld [vmem:[#allocation2 + $0x58] sm:$0xff]
    %v180 = vld [vmem:[#allocation2 + $0x60] sm:$0xff]
    %v181 = vld [vmem:[#allocation2 + $0x68] sm:$0xff]
    %v182 = vld [vmem:[#allocation2 + $0x70] sm:$0xff]
    %v183 = vld [vmem:[#allocation2 + $0x78] sm:$0xff]
    %v184 = vmul.f32 %v168, %v130
    %v185 = vmul.f32 %v169, %v132
    %v186 = vmul.f32 %v170, %v134
    %v187 = vmul.f32 %v171, %v136
    %v188 = vmul.f32 %v172, %v138
    %v189 = vmul.f32 %v173, %v140
    %v190 = vmul.f32 %v174, %v142
    %v191 = vmul.f32 %v175, %v144
    %v192 = vmul.f32 %v176, %v146
    %v193 = vmul.f32 %v177, %v148
    %v194 = vmul.f32 %v178, %v150
    %v195 = vmul.f32 %v179, %v152
    %v196 = vmul.f32 %v180, %v154
    %v197 = vmul.f32 %v181, %v156
    %v198 = vmul.f32 %v182, %v158
    %v199 = vmul.f32 %v183, %v160
    %v200 = vpack.c.bf16 %v185, %v184
    %v201 = vpack.c.bf16 %v187, %v186
    %v202 = vpack.c.bf16 %v189, %v188
    %v203 = vpack.c.bf16 %v191, %v190
    %v204 = vpack.c.bf16 %v193, %v192
    %v205 = vpack.c.bf16 %v195, %v194
    %v206 = vpack.c.bf16 %v197, %v196
    %v207 = vpack.c.bf16 %v199, %v198
    %v216 = vunpack.c.l.b16 %v200
    %v217 = vunpack.c.h.b16 %v200
    %v218 = vunpack.c.l.b16 %v201
    %v219 = vunpack.c.h.b16 %v201
    %v220 = vunpack.c.l.b16 %v202
    %v221 = vunpack.c.h.b16 %v202
    %v222 = vunpack.c.l.b16 %v203
    %v223 = vunpack.c.h.b16 %v203
    %v224 = vunpack.c.l.b16 %v204
    %v225 = vunpack.c.h.b16 %v204
    %v226 = vunpack.c.l.b16 %v205
    %v227 = vunpack.c.h.b16 %v205
    %v228 = vunpack.c.l.b16 %v206
    %v229 = vunpack.c.h.b16 %v206
    %v230 = vunpack.c.l.b16 %v207
    %v231 = vunpack.c.h.b16 %v207
    %v232 = vpack.c.b16 %v216, %v216
    %v233 = vpack.c.b16 %v217, %v217
    %v234 = vpack.c.b16 %v218, %v218
    %v235 = vpack.c.b16 %v219, %v219
    %v236 = vpack.c.b16 %v220, %v220
    %v237 = vpack.c.b16 %v221, %v221
    %v238 = vpack.c.b16 %v222, %v222
    %v239 = vpack.c.b16 %v223, %v223
    %v240 = vpack.c.b16 %v224, %v224
    %v241 = vpack.c.b16 %v225, %v225
    %v242 = vpack.c.b16 %v226, %v226
    %v243 = vpack.c.b16 %v227, %v227
    %v244 = vpack.c.b16 %v228, %v228
    %v245 = vpack.c.b16 %v229, %v229
    %v246 = vpack.c.b16 %v230, %v230
    %v247 = vpack.c.b16 %v231, %v231
    %264 = vst [vmem:[#allocation7] sm:$0xf] %v232
    %265 = vst [vmem:[#allocation7 + $0x4] sm:$0xf] %v233
    %266 = vst [vmem:[#allocation7 + $0x8] sm:$0xf] %v234
    %267 = vst [vmem:[#allocation7 + $0xc] sm:$0xf] %v235
    %268 = vst [vmem:[#allocation7 + $0x10] sm:$0xf] %v236
    %269 = vst [vmem:[#allocation7 + $0x14] sm:$0xf] %v237
    %270 = vst [vmem:[#allocation7 + $0x18] sm:$0xf] %v238
    %271 = vst [vmem:[#allocation7 + $0x1c] sm:$0xf] %v239
    %272 = vst [vmem:[#allocation7 + $0x20] sm:$0xf] %v240
    %273 = vst [vmem:[#allocation7 + $0x24] sm:$0xf] %v241
    %274 = vst [vmem:[#allocation7 + $0x28] sm:$0xf] %v242
    %275 = vst [vmem:[#allocation7 + $0x2c] sm:$0xf] %v243
    %276 = vst [vmem:[#allocation7 + $0x30] sm:$0xf] %v244
    %277 = vst [vmem:[#allocation7 + $0x34] sm:$0xf] %v245
    %278 = vst [vmem:[#allocation7 + $0x38] sm:$0xf] %v246
    %279 = vst [vmem:[#allocation7 + $0x3c] sm:$0xf] %v247
    %v280 = vld [vmem:[%s2] sm:$0x1]
    %v281 = vmul.f32 %v280, %v167
    %282 = vst [vmem:[#allocation8] sm:$0x1] %v281
    // Predicated region
    $region26: #{tpu_custom_call.1} parent=1 // pred_check
      _
    $region27: #{tpu_custom_call.1} parent=1 // pred_check_branch
      %284 = sbr.rel (0) target = $region29
    $region28: #{tpu_custom_call.1} parent=1 // pred_region
      %s286 = ssub.s32 1024, 1024
      %287 = vsyncadd [#allocation4], %s286
      %s288 = sshll.u32 [#allocation7], 4
      %s289 = int_to_ptr.vmem [resolvable:$true] %s288
      %294 = dma.vmem_to_hbm [thread:$0]  %s289, 1024, %s4, [#allocation4], 64, 64, 4
    $region29: #{tpu_custom_call.1} parent=1 // pred_fallthru
      _
    // Predicated region
    $region30: #{tpu_custom_call.1} parent=1 // pred_check
      _
    $region31: #{tpu_custom_call.1} parent=1 // pred_check_branch
      %296 = sbr.rel (0) target = $region33
    $region32: #{tpu_custom_call.1} parent=1 // pred_region
      %s298 = ssub.s32 16, 16
      %299 = vsyncadd [#allocation9], %s298
      %s301 = sshll.u32 [#allocation8], 4
      %s302 = int_to_ptr.vmem [resolvable:$true] %s301
      %304 = dma.vmem_to_hbm [thread:$0]  %s302, 16, %s5, [#allocation9]
    $region33: #{tpu_custom_call.1} parent=1 // pred_fallthru
      _
    // Predicated region
    $region34: #{tpu_custom_call.1} parent=1 // pred_check
      _
    $region35: #{tpu_custom_call.1} parent=1 // pred_check_branch
      %306 = sbr.rel (0) target = $region37
    $region36: #{tpu_custom_call.1} parent=1 // pred_region
      %307 = dma.done [#allocation4], 1024
    $region37: #{tpu_custom_call.1} parent=1 // pred_fallthru
      _
    // Predicated region
    $region38: #{tpu_custom_call.1} parent=1 // pred_check
      _
    $region39: #{tpu_custom_call.1} parent=1 // pred_check_branch
      %309 = sbr.rel (0) target = $region41
    $region40: #{tpu_custom_call.1} parent=1 // pred_region
      %310 = dma.done [#allocation9], 16
    $region41: #{tpu_custom_call.1} parent=1 // pred_fallthru
      _
    %311 = vsyncpa [#allocation3], 1
    %312 = vsyncpa [#allocation6], 1
    %313 = vsyncpa [#allocation4], 1
    %314 = vsyncpa [#allocation9], 1

</llo_original>
